<compile_context>
chip_gen: v5e
topology: v5e:2x2
jax: 0.10.0
libtpu: 0.0.40
codegen_flags: <defaults>
</compile_context>

<pallas_src>
import functools
import math

import jax
import jax.numpy as jnp
from jax.experimental import pallas as pl
from jax.experimental.pallas import tpu as pltpu

# ----------------------------------------------------------------------------
# constants from the PyTorch module
# ----------------------------------------------------------------------------
EMB = {
    "club_member_status": 4,
    "fashion_news_frequency": 5,
    "postal_code": 352899,
    "article_code": 105545,
    "position": 2000,
}
BIG_NEG = -1.0e30          # finite "-inf" for additive masks (avoids NaN paths)
TN_CLS = 4224              # classifier N tile: 128*33; 105600 = 25 * 4224


def _ceil_to(x, m):
    return ((x + m - 1) // m) * m


# ----------------------------------------------------------------------------
# Pallas kernels
# ----------------------------------------------------------------------------
def _linear_kernel(x_ref, w_ref, b_ref, o_ref, *, activation):
    x = x_ref[...].astype(jnp.bfloat16)
    r = jnp.dot(x, w_ref[...], preferred_element_type=jnp.float32) + b_ref[...]
    if activation == "relu":
        r = jnp.maximum(r, 0.0)
    elif activation == "leaky_relu":
        r = jnp.where(r >= 0.0, r, 0.01 * r)
    o_ref[...] = r


def pallas_linear(x, w, b, activation="none"):
    """y = act(x @ w + b); x:(M,K) f32, w:(K,N) bf16, b:(1,N) f32 -> (M,N) f32."""
    M, K = x.shape
    Kw, N = w.shape
    assert K == Kw, (K, Kw)
    return pl.pallas_call(
        functools.partial(_linear_kernel, activation=activation),
        out_shape=jax.ShapeDtypeStruct((M, N), jnp.float32),
        grid_spec=pltpu.PrefetchScalarGridSpec(
            num_scalar_prefetch=0,
            grid=(1,),
            in_specs=[pl.BlockSpec((M, K), lambda i: (0, 0)),
                      pl.BlockSpec((K, N), lambda i: (0, 0)),
                      pl.BlockSpec((1, N), lambda i: (0, 0))],
            out_specs=pl.BlockSpec((M, N), lambda i: (0, 0)),
        ),
    )(x, w, b)


def _ffn_kernel(x_ref, w1_ref, b1_ref, w2_ref, b2_ref, o_ref):
    x = x_ref[...].astype(jnp.bfloat16)
    h = jnp.dot(x, w1_ref[...], preferred_element_type=jnp.float32) + b1_ref[...]
    h = jnp.maximum(h, 0.0).astype(jnp.bfloat16)
    o_ref[...] = (jnp.dot(h, w2_ref[...], preferred_element_type=jnp.float32)
                  + b2_ref[...])


def pallas_ffn(x2d, p):
    """Fused linear->relu->linear; 2048-wide hidden never leaves VMEM."""
    M, E = x2d.shape
    F = p["w1"].shape[1]
    Eo = p["w2"].shape[1]
    return pl.pallas_call(
        _ffn_kernel,
        out_shape=jax.ShapeDtypeStruct((M, Eo), jnp.float32),
        grid_spec=pltpu.PrefetchScalarGridSpec(
            num_scalar_prefetch=0,
            grid=(1,),
            in_specs=[pl.BlockSpec((M, E), lambda i: (0, 0)),
                      pl.BlockSpec((E, F), lambda i: (0, 0)),
                      pl.BlockSpec((1, F), lambda i: (0, 0)),
                      pl.BlockSpec((F, Eo), lambda i: (0, 0)),
                      pl.BlockSpec((1, Eo), lambda i: (0, 0))],
            out_specs=pl.BlockSpec((M, Eo), lambda i: (0, 0)),
        ),
    )(x2d, p["w1"], p["b1"], p["w2"], p["b2"])


def _add_ln_kernel(x_ref, y_ref, g_ref, b_ref, o_ref, *, eps):
    x = x_ref[...] + y_ref[...]
    mu = jnp.mean(x, axis=-1, keepdims=True)
    var = jnp.mean((x - mu) ** 2, axis=-1, keepdims=True)
    o_ref[...] = (x - mu) * jax.lax.rsqrt(var + eps) * g_ref[...] + b_ref[...]


def add_layernorm(x, y, p, eps=1e-5):
    """LayerNorm(x + y) with the residual add fused into the kernel."""
    shp = x.shape
    E = shp[-1]
    x2 = x.reshape(-1, E).astype(jnp.float32)
    y2 = y.reshape(-1, E).astype(jnp.float32)
    M = x2.shape[0]
    out = pl.pallas_call(
        functools.partial(_add_ln_kernel, eps=eps),
        out_shape=jax.ShapeDtypeStruct((M, E), jnp.float32),
        grid_spec=pltpu.PrefetchScalarGridSpec(
            num_scalar_prefetch=0,
            grid=(1,),
            in_specs=[pl.BlockSpec((M, E), lambda i: (0, 0)),
                      pl.BlockSpec((M, E), lambda i: (0, 0)),
                      pl.BlockSpec((1, E), lambda i: (0, 0)),
                      pl.BlockSpec((1, E), lambda i: (0, 0))],
            out_specs=pl.BlockSpec((M, E), lambda i: (0, 0)),
        ),
    )(x2, y2, p["g"], p["b"])
    return out.reshape(shp)


def _attention_kernel(q_ref, k_ref, v_ref, bias_ref, o_ref, *, scale, bh):
    # All heads of the call in one invocation; BH <= 8, statically unrolled.
    for i in range(bh):
        q = q_ref[i]
        k = k_ref[i]
        v = v_ref[i]
        s = jax.lax.dot_general(q, k, (((1,), (1,)), ((), ())),
                                preferred_element_type=jnp.float32)
        s = s * scale + bias_ref[i]
        m = jnp.max(s, axis=-1, keepdims=True)
        p = jnp.exp(s - m)
        denom = jnp.maximum(jnp.sum(p, axis=-1, keepdims=True), 1e-30)
        o = jnp.dot(p, v, preferred_element_type=jnp.float32)
        o_ref[i] = o * pl.reciprocal(denom, approx=True)


def pallas_attention(q, k, v, bias, scale):
    """q:(BH,Lq,dh) k,v:(BH,Lk,dh) bias:(BH,Lq,Lk) -> (BH,Lq,dh); one grid step."""
    BH, Lq, dh = q.shape
    Lk = k.shape[1]
    return pl.pallas_call(
        functools.partial(_attention_kernel, scale=scale, bh=BH),
        out_shape=jax.ShapeDtypeStruct((BH, Lq, dh), jnp.float32),
        grid_spec=pltpu.PrefetchScalarGridSpec(
            num_scalar_prefetch=0,
            grid=(1,),
            in_specs=[pl.BlockSpec((BH, Lq, dh), lambda i: (0, 0, 0)),
                      pl.BlockSpec((BH, Lk, dh), lambda i: (0, 0, 0)),
                      pl.BlockSpec((BH, Lk, dh), lambda i: (0, 0, 0)),
                      pl.BlockSpec((BH, Lq, Lk), lambda i: (0, 0, 0))],
            out_specs=pl.BlockSpec((BH, Lq, dh), lambda i: (0, 0, 0)),
        ),
    )(q.astype(jnp.float32), k.astype(jnp.float32),
      v.astype(jnp.float32), bias.astype(jnp.float32))


def _classifier_kernel(x_ref, w_ref, b_ref, o_ref, pmax_ref, parg_ref,
                       *, n_valid, tn):
    j = pl.program_id(0)
    x = x_ref[...].astype(jnp.bfloat16)
    r = jnp.dot(x, w_ref[...], preferred_element_type=jnp.float32) + b_ref[...]
    r = jnp.maximum(r, 0.0)                                   # ReLU logits
    o_ref[...] = r
    # fused per-tile argmax (partial results; tiny cross-tile reduce done in JAX)
    col = jax.lax.broadcasted_iota(jnp.int32, r.shape, 1) + j * tn
    rm = jnp.where(col < n_valid, r, BIG_NEG)
    tmax = jnp.max(rm, axis=-1, keepdims=True)
    targ = jnp.min(jnp.where(rm == tmax, col, jnp.int32(2 ** 30)),
                   axis=-1, keepdims=True)
    pmax_ref[0] = tmax
    parg_ref[0] = targ


def pallas_classifier(x, w, b, n_out):
    """relu(x @ w + b) with fused row-wise argmax.

    x:(M,256) f32, w:(256, Np) bf16 pre-padded (Np = ceil(n_out, TN_CLS)),
    b:(1, Np) f32.  Returns (logits (M, n_out) f32, argmax (M,) int32).
    """
    M, K = x.shape
    Kw, Np = w.shape
    assert K == Kw and Np % TN_CLS == 0
    tn = TN_CLS
    nj = Np // tn
    logits, pmax, parg = pl.pallas_call(
        functools.partial(_classifier_kernel, n_valid=n_out, tn=tn),
        out_shape=(jax.ShapeDtypeStruct((M, n_out), jnp.float32),
                   jax.ShapeDtypeStruct((nj, M, 1), jnp.float32),
                   jax.ShapeDtypeStruct((nj, M, 1), jnp.int32)),
        grid_spec=pltpu.PrefetchScalarGridSpec(
            num_scalar_prefetch=0,
            grid=(nj,),
            in_specs=[pl.BlockSpec((M, K), lambda j: (0, 0)),
                      pl.BlockSpec((K, tn), lambda j: (0, j)),
                      pl.BlockSpec((1, tn), lambda j: (0, j))],
            out_specs=(pl.BlockSpec((M, tn), lambda j: (0, j)),
                       pl.BlockSpec((1, M, 1), lambda j: (j, 0, 0)),
                       pl.BlockSpec((1, M, 1), lambda j: (j, 0, 0))),
        ),
        compiler_params=pltpu.CompilerParams(
            dimension_semantics=("parallel",)),
    )(x, w, b)
    pm = pmax[:, :, 0]                       # (nj, M)
    pa = parg[:, :, 0]                       # (nj, M)
    best = jnp.argmax(pm, axis=0)            # first tile holding the global max
    pred = jnp.take_along_axis(pa, best[None, :], axis=0)[0]
    return logits, pred


# ----------------------------------------------------------------------------
# attention / transformer building blocks (glue around the Pallas kernels)
# ----------------------------------------------------------------------------
def _split_heads(x2d, L, B, H, dh):
    return x2d.reshape(L, B, H, dh).transpose(1, 2, 0, 3).reshape(B * H, L, dh)


def _merge_heads(x3d, L, B, H, dh):
    return x3d.reshape(B, H, L, dh).transpose(2, 0, 1, 3).reshape(L, B, H * dh)


def _attn_bias(B, H, Lq, Lk, key_padding_mask, attn_mask):
    bias = jnp.zeros((B, H, Lq, Lk), jnp.float32)
    if key_padding_mask is not None:        # (B, Lk) bool, True = ignore
        bias = bias + jnp.where(key_padding_mask[:, None, None, :], BIG_NEG, 0.0)
    if attn_mask is not None:               # (Lq, Lk) float additive
        bias = bias + attn_mask[None, None, :, :]
    return bias.reshape(B * H, Lq, Lk)


def mha_self(x, p, num_heads, key_padding_mask=None, attn_mask=None):
    L, B, E = x.shape
    H = num_heads
    dh = E // H
    qkv = pallas_linear(x.reshape(L * B, E), p["w_qkv"], p["b_qkv"])   # one call
    q = _split_heads(qkv[:, :E], L, B, H, dh)
    k = _split_heads(qkv[:, E:2 * E], L, B, H, dh)
    v = _split_heads(qkv[:, 2 * E:], L, B, H, dh)
    bias = _attn_bias(B, H, L, L, key_padding_mask, attn_mask)
    o = pallas_attention(q, k, v, bias, 1.0 / math.sqrt(dh))
    o = _merge_heads(o, L, B, H, dh).reshape(L * B, E)
    return pallas_linear(o, p["out_w"], p["out_b"]).reshape(L, B, E)


def mha_cross(x, memory, p, num_heads):
    Lq, B, E = x.shape
    Lk = memory.shape[0]
    H = num_heads
    dh = E // H
    q = pallas_linear(x.reshape(Lq * B, E), p["w_q"], p["b_q"])
    kv = pallas_linear(memory.reshape(Lk * B, E), p["w_kv"], p["b_kv"])
    q = _split_heads(q, Lq, B, H, dh)
    k = _split_heads(kv[:, :E], Lk, B, H, dh)
    v = _split_heads(kv[:, E:], Lk, B, H, dh)
    bias = jnp.zeros((B * H, Lq, Lk), jnp.float32)
    o = pallas_attention(q, k, v, bias, 1.0 / math.sqrt(dh))
    o = _merge_heads(o, Lq, B, H, dh).reshape(Lq * B, E)
    return pallas_linear(o, p["out_w"], p["out_b"]).reshape(Lq, B, E)


def encoder_layer(x, p, nhead, key_padding_mask=None, attn_mask=None):
    # post-norm TransformerEncoderLayer (dropout = identity in eval)
    L, B, E = x.shape
    a = mha_self(x, p["attn"], nhead, key_padding_mask, attn_mask)
    x = add_layernorm(x, a, p["ln1"])
    h = pallas_ffn(x.reshape(L * B, E), p["ffn"]).reshape(L, B, E)
    return add_layernorm(x, h, p["ln2"])


def decoder_layer(tgt, memory, p, nhead, tgt_mask=None, tgt_kpm=None):
    L, B, E = tgt.shape
    a = mha_self(tgt, p["self"], nhead, tgt_kpm, tgt_mask)
    x = add_layernorm(tgt, a, p["ln1"])
    a = mha_cross(x, memory, p["cross"], nhead)
    x = add_layernorm(x, a, p["ln2"])
    h = pallas_ffn(x.reshape(L * B, E), p["ffn"]).reshape(L, B, E)
    return add_layernorm(x, h, p["ln3"])


# ----------------------------------------------------------------------------
# mask / position helpers (mirror the PyTorch helper classes)
# ----------------------------------------------------------------------------
def padding_mask(x, value=0):
    return (x == value).T                                   # (B, L) bool


def causal_mask(L):
    return jnp.triu(jnp.full((L, L), BIG_NEG, jnp.float32), k=1)


def positions(x):
    L, B = x.shape
    return jnp.broadcast_to(jnp.arange(L, dtype=jnp.int32)[:, None], (L, B))


# ----------------------------------------------------------------------------
# module forwards
# ----------------------------------------------------------------------------
def vector_forward(P, b):
    x = jnp.concatenate([b["FN"], b["Active"], b["age"]], axis=1)        # (B, 3)
    v0 = pallas_linear(x, P["fn"]["w"], P["fn"]["b"], "leaky_relu")      # (B, 64)
    # TODO(synk): embedding gathers use jnp.take (no clean Pallas gather here)
    v1 = jnp.take(P["emb_club"], b["club_member_status"], axis=0)[0]     # (B, 32)
    v2 = jnp.take(P["emb_fnf"], b["fashion_news_frequency"], axis=0)[0]  # (B, 32)
    v3 = jnp.take(P["emb_postal"], b["postal_code"], axis=0)[0]          # (B, 128)
    v = jnp.concatenate([v0, v1, v2, v3], axis=1)                        # (B, 256)
    return pallas_linear(v, P["core1"]["w"], P["core1"]["b"], "relu")    # (B, 64)


def sequence_forward(P, b):
    v = {"article_code": {}, "price": {}}
    ah, af = b["article_code"]["history"], b["article_code"]["future"]
    e = jnp.take(P["emb_article"], ah, axis=0)
    p = jnp.take(P["emb_pos"], positions(ah), axis=0)
    v["article_code"]["history"] = encoder_layer(
        e + p, P["enc_article"], nhead=4, key_padding_mask=padding_mask(ah, 0))
    e = jnp.take(P["emb_article"], af, axis=0)
    p = jnp.take(P["emb_pos"], positions(af), axis=0)
    v["article_code"]["future"] = e + p

    ph, pf = b["price"]["history"], b["price"]["future"]
    v["price"]["history"] = encoder_layer(
        ph[..., None], P["enc_price"], nhead=1,
        key_padding_mask=padding_mask(ph, 0))
    v["price"]["future"] = pf[..., None]
    return v


def fusion_forward(P, b):
    vec = vector_forward(P["vector"], b)                    # (B, 64)
    seq = sequence_forward(P["sequence"], b)
    hist = seq["article_code"]["history"]                   # (Lh, B, 256)
    Lh, B, _ = hist.shape
    v = jnp.broadcast_to(vec[None], (Lh, B, vec.shape[-1]))
    v = jnp.concatenate([hist, v], axis=2)                  # (Lh, B, 320)
    v = jnp.concatenate([seq["price"]["history"], v], axis=2)   # (Lh, B, 321)
    v = encoder_layer(v, P["enc_core"], nhead=1,
                      key_padding_mask=padding_mask(b["article_code"]["history"], 0))
    L, B, E = v.shape
    v = pallas_linear(v.reshape(L * B, E), P["core2"]["w"], P["core2"]["b"],
                      "relu").reshape(L, B, 256)
    v2 = pallas_linear(v.reshape(L * B, 256), P["core3"]["w"], P["core3"]["b"],
                       "relu").reshape(L, B, 256)
    memory = v2 + v
    return vec, seq, memory


def suggestion_forward(P, b):
    _, seq, memory = fusion_forward(P["fusion"], b)
    af = b["article_code"]["future"]
    origin = seq["article_code"]["future"][:-1]             # (Lf-1, B, 256)
    Lt, B, E = origin.shape
    tgt_mask = causal_mask(Lt)
    tgt_kpm = padding_mask(af[:-1], 0)

    v = origin
    for layer in P["decoder"]:
        v = decoder_layer(v, memory, layer, nhead=2,
                          tgt_mask=tgt_mask, tgt_kpm=tgt_kpm)
    v2 = pallas_linear(v.reshape(Lt * B, E), P["core2"]["w"], P["core2"]["b"],
                       "relu").reshape(Lt, B, E)
    upgrade = v2 + v

    positive = (upgrade, seq["article_code"]["future"][1:],
                2 * (af[1:] == af[1:]).astype(jnp.int32) - 1)

    # (Lt*B, 105545) relu logits with fused row-wise argmax
    lik2d, pred_flat = pallas_classifier(upgrade.reshape(Lt * B, E),
                                         P["core3"]["w"], P["core3"]["b"],
                                         EMB["article_code"])
    likelihood = lik2d.reshape(Lt, B, EMB["article_code"])
    prediction = pred_flat.reshape(Lt, B)                   # int32
    hit = 2 * (prediction == af[1:]).astype(jnp.int32) - 1

    seqP = P["fusion"]["sequence"]
    e = jnp.take(seqP["emb_article"], prediction, axis=0)
    p = jnp.take(seqP["emb_pos"], positions(prediction), axis=0)
    negative = (upgrade, e + p, hit)
    return likelihood, prediction, positive, negative


# ----------------------------------------------------------------------------
# deterministic parameter init (shapes follow the module __init__)
# weights stored in bf16 (pre-padded once where the kernel tiles require it)
# ----------------------------------------------------------------------------
def init_params(seed=0):
    key = jax.random.PRNGKey(seed)
    cnt = [0]

    def nrm(*shape):
        cnt[0] += 1
        return 0.02 * jax.random.normal(jax.random.fold_in(key, cnt[0]),
                                        shape, jnp.float32)

    def zb(n):
        return jnp.zeros((1, n), jnp.float32)

    def lin(i, o):
        return {"w": nrm(i, o).astype(jnp.bfloat16), "b": zb(o)}

    def cls_lin(i, o):
        # vocabulary projection: pad N once at init to an exact tile multiple
        op = _ceil_to(o, TN_CLS)
        w = jnp.pad(nrm(i, o), ((0, 0), (0, op - o))).astype(jnp.bfloat16)
        return {"w": w, "b": zb(op)}

    def mha(e):
        wq, wk, wv, wo = nrm(e, e), nrm(e, e), nrm(e, e), nrm(e, e)
        return {"w_qkv": jnp.concatenate([wq, wk, wv], 1).astype(jnp.bfloat16),
                "b_qkv": zb(3 * e),
                "w_q": wq.astype(jnp.bfloat16), "b_q": zb(e),
                "w_kv": jnp.concatenate([wk, wv], 1).astype(jnp.bfloat16),
                "b_kv": zb(2 * e),
                "out_w": wo.astype(jnp.bfloat16), "out_b": zb(e)}

    def ln(e):
        return {"g": jnp.ones((1, e), jnp.float32), "b": jnp.zeros((1, e), jnp.float32)}

    def ffn(e, f=2048):
        return {"w1": nrm(e, f).astype(jnp.bfloat16), "b1": zb(f),
                "w2": nrm(f, e).astype(jnp.bfloat16), "b2": zb(e)}

    def enc(e):
        return {"attn": mha(e), "ffn": ffn(e), "ln1": ln(e), "ln2": ln(e)}

    def dec(e):
        return {"self": mha(e), "cross": mha(e), "ffn": ffn(e),
                "ln1": ln(e), "ln2": ln(e), "ln3": ln(e)}

    return {
        "fusion": {
            "vector": {
                "fn": lin(3, 64),
                "emb_club": nrm(EMB["club_member_status"], 32),
                "emb_fnf": nrm(EMB["fashion_news_frequency"], 32),
                "emb_postal": nrm(EMB["postal_code"], 128),
                "core1": lin(64 + 32 + 32 + 128, 64),
            },
            "sequence": {
                "emb_article": nrm(EMB["article_code"], 256),
                "emb_pos": nrm(EMB["position"], 256),
                "enc_article": enc(256),
                "enc_price": enc(1),
            },
            "enc_core": enc(64 + 256 + 1),
            "core2": lin(64 + 256 + 1, 256),
            "core3": lin(256, 256),
        },
        "decoder": [dec(256), dec(256)],
        "core2": lin(256, 256),
        "core3": cls_lin(256, EMB["article_code"]),
    }


# ----------------------------------------------------------------------------
# main
# ----------------------------------------------------------------------------
if __name__ == "__main__":
    B, Lh, Lf = 2, 8, 6
    kk = jax.random.split(jax.random.PRNGKey(0), 10)

    ah = jax.random.randint(kk[0], (Lh, B), 1, EMB["article_code"], jnp.int32)
    ah = ah.at[Lh - 1, :].set(0)                            # trailing padding tokens
    af = jax.random.randint(kk[1], (Lf, B), 1, EMB["article_code"], jnp.int32)
    ph = jax.random.uniform(kk[2], (Lh, B), jnp.float32, 0.5, 3.0)
    ph = ph.at[Lh - 1, :].set(0.0)                          # padded prices
    pf = jax.random.uniform(kk[3], (Lf, B), jnp.float32, 0.5, 3.0)

    batch = {
        "article_code": {"history": ah, "future": af},
        "price": {"history": ph, "future": pf},
        "FN": jax.random.normal(kk[4], (B, 1), jnp.float32),
        "Active": jax.random.normal(kk[5], (B, 1), jnp.float32),
        "age": jax.random.normal(kk[6], (B, 1), jnp.float32),
        "club_member_status": jax.random.randint(kk[7], (1, B), 0, EMB["club_member_status"], jnp.int32),
        "fashion_news_frequency": jax.random.randint(kk[8], (1, B), 0, EMB["fashion_news_frequency"], jnp.int32),
        "postal_code": jax.random.randint(kk[9], (1, B), 0, EMB["postal_code"], jnp.int32),
    }

    params = init_params(0)
    likelihood, prediction, positive, negative = suggestion_forward(params, batch)
    jax.block_until_ready((likelihood, prediction, positive, negative))

    assert likelihood.shape == (Lf - 1, B, EMB["article_code"])
    assert prediction.shape == (Lf - 1, B)
    assert positive[1].shape == (Lf - 1, B, 256)
    assert negative[1].shape == (Lf - 1, B, 256)
    print("KERNEL_OK")
</pallas_src>

<mosaic_0001>
module attributes {stable_mosaic.version = 11 : i64} {
  func.func @_linear_kernel(%arg0: i32, %arg1: memref<2x3xf32, #tpu.memory_space<vmem>>, %arg2: memref<3x64xbf16, #tpu.memory_space<vmem>>, %arg3: memref<1x64xf32, #tpu.memory_space<vmem>>, %arg4: memref<2x64xf32, #tpu.memory_space<vmem>>) attributes {dimension_semantics = [#tpu.dimension_semantics<arbitrary>], iteration_bounds = array<i64: 1>, scalar_prefetch = 0 : i64, scratch_operands = 0 : i64, tpu.core_type = #tpu.core_type<tc>, window_params = [{pipeline_mode = #tpu.pipeline_mode<synchronous>, transform_indices = @transform_0, window_bounds = array<i64: 2, 3>}, {pipeline_mode = #tpu.pipeline_mode<synchronous>, transform_indices = @transform_1, window_bounds = array<i64: 3, 64>}, {pipeline_mode = #tpu.pipeline_mode<synchronous>, transform_indices = @transform_2, window_bounds = array<i64: 1, 64>}, {pipeline_mode = #tpu.pipeline_mode<synchronous>, transform_indices = @transform_3, window_bounds = array<i64: 2, 64>}]} {
    %c0 = arith.constant 0 : index
    %c0_0 = arith.constant 0 : index
    %0 = vector.load %arg1[%c0, %c0_0] : memref<2x3xf32, #tpu.memory_space<vmem>>, vector<2x3xf32>
    %1 = arith.truncf %0 : vector<2x3xf32> to vector<2x3xbf16>
    %c0_1 = arith.constant 0 : index
    %c0_2 = arith.constant 0 : index
    %2 = vector.load %arg2[%c0_1, %c0_2] : memref<3x64xbf16, #tpu.memory_space<vmem>>, vector<3x64xbf16>
    %cst = arith.constant dense<0.000000e+00> : vector<2x64xf32>
    %3 = tpu.matmul %1, %2, %cst {dimension_numbers = #tpu.dot_dimension_numbers<[1], [0], [0], [1], [0, 0, 1, 1], [], []>} : vector<2x3xbf16>, vector<3x64xbf16>, vector<2x64xf32> -> vector<2x64xf32>
    %c0_3 = arith.constant 0 : index
    %c0_4 = arith.constant 0 : index
    %4 = vector.load %arg3[%c0_3, %c0_4] : memref<1x64xf32, #tpu.memory_space<vmem>>, vector<1x64xf32>
    %5 = vector.broadcast %4 : vector<1x64xf32> to vector<2x64xf32>
    %6 = arith.addf %3, %5 : vector<2x64xf32>
    %cst_5 = arith.constant 0.000000e+00 : f32
    %7 = vector.broadcast %cst_5 : f32 to vector<2x64xf32>
    %8 = arith.cmpf oge, %6, %7 : vector<2x64xf32>
    %cst_6 = arith.constant 0.00999999977 : f32
    %9 = vector.broadcast %cst_6 : f32 to vector<2x64xf32>
    %10 = arith.mulf %9, %6 : vector<2x64xf32>
    %11 = arith.select %8, %6, %10 : vector<2x64xi1>, vector<2x64xf32>
    %c0_7 = arith.constant 0 : index
    %c0_8 = arith.constant 0 : index
    %12 = vector.load %arg4[%c0_7, %c0_8] : memref<2x64xf32, #tpu.memory_space<vmem>>, vector<2x64xf32>
    tpu.vector_store %arg4[%c0_7, %c0_8], %11 {strides = array<i32>} : memref<2x64xf32, #tpu.memory_space<vmem>>, vector<2x64xf32>,
    return
  }
  func.func @transform_0(%arg0: i32) -> (i32, i32) {
    %c0_i32 = arith.constant 0 : i32
    %c0_i32_0 = arith.constant 0 : i32
    %c0_i32_1 = arith.constant 0 : i32
    return %c0_i32, %c0_i32_0 : i32, i32
  }
  func.func @transform_1(%arg0: i32) -> (i32, i32) {
    %c0_i32 = arith.constant 0 : i32
    %c0_i32_0 = arith.constant 0 : i32
    %c0_i32_1 = arith.constant 0 : i32
    return %c0_i32, %c0_i32_0 : i32, i32
  }
  func.func @transform_2(%arg0: i32) -> (i32, i32) {
    %c0_i32 = arith.constant 0 : i32
    %c0_i32_0 = arith.constant 0 : i32
    %c0_i32_1 = arith.constant 0 : i32
    return %c0_i32, %c0_i32_0 : i32, i32
  }
  func.func @transform_3(%arg0: i32) -> (i32, i32) {
    %c0_i32 = arith.constant 0 : i32
    %c0_i32_0 = arith.constant 0 : i32
    %c0_i32_1 = arith.constant 0 : i32
    return %c0_i32, %c0_i32_0 : i32, i32
  }
}

</mosaic_0001>

<llo_original>
// kernel: tpu_custom_call.1
$region0: #{tpu_custom_call.1}
  #allocation0 [shape = 'u32[]', space=smem, size = 0x4, offset = 0x4, fixed_abs, tag = 'smem constant byte address 0x4 - core index']
  #allocation1 [shape = 'u32[72,128]{1,0:T(1,128)}', space=vmem, size = 0x9000, scoped, tag = 'internal scratch']
  %s0 = inlined_call_operand.hbm [shape: f32[2,3], index: 0, kind: input, shape index: {}]
  %s1 = inlined_call_operand.hbm [shape: bf16[3,64], index: 1, kind: input, shape index: {}]
  %s2 = inlined_call_operand.vmem [shape: f32[1,64], index: 2, kind: input, shape index: {}]
  %s3 = inlined_call_operand.hbm [shape: f32[2,64], index: 3, kind: output, shape index: {}]
  %s4 = sld [smem:[#allocation0]]
  $region30: #{tpu_custom_call.1} parent=0
    _
  %s6 = ssub.s32 1, %s4
  %s7 = scalar_select 0, %s6, %s4
  $region1: #{tpu_custom_call.1} parent=0
    #allocation2 [shape = 'u8[1024]{0}', space=vmem, size = 0x400, scoped, tag = 'input window, operand 0, single buffered']
    #allocation3 [shape = 's32[1]{0}', space=sflag, size = 0x4, scoped, tag = 'scoped memory for tpu_custom_call.1']
    #allocation4 [shape = 's32[1]{0}', space=sflag, size = 0x4, scoped, tag = 'scoped memory for tpu_custom_call.1']
    #allocation5 [shape = 'u8[1024]{0}', space=vmem, size = 0x400, scoped, tag = 'input window, operand 1, single buffered']
    #allocation6 [shape = 's32[1]{0}', space=sflag, size = 0x4, scoped, tag = 'scoped memory for tpu_custom_call.1']
    #allocation7 [shape = 'u8[1024]{0}', space=vmem, size = 0x400, scoped, tag = 'output window, operand 0, single buffered']
    %8 = vsyncpa [#allocation3], 0
    %9 = vsyncpa [#allocation6], 0
    %10 = vsyncpa [#allocation4], 0
    // Predicated region
    $region2: #{tpu_custom_call.1} parent=1 // pred_check
      _
    $region3: #{tpu_custom_call.1} parent=1 // pred_check_branch
      %12 = sbr.rel (0) target = $region5
    $region4: #{tpu_custom_call.1} parent=1 // pred_region
      %14 = vsyncadd [#allocation3], 0
      %s16 = sshll.u32 %s0, 4
      %s17 = int_to_ptr.hbm [resolvable:$true] %s16
      %s18 = sshll.u32 [#allocation2], 4
      %s19 = int_to_ptr.vmem [resolvable:$true] %s18
      %21 = dma.hbm_to_vmem [thread:$0]  %s17, 32, %s19, [#allocation3]
    $region5: #{tpu_custom_call.1} parent=1 // pred_fallthru
      _
    // Predicated region
    $region6: #{tpu_custom_call.1} parent=1 // pred_check
      _
    $region7: #{tpu_custom_call.1} parent=1 // pred_check_branch
      %23 = sbr.rel (0) target = $region9
    $region8: #{tpu_custom_call.1} parent=1 // pred_region
      %25 = vsyncadd [#allocation6], 0
      %s27 = sshll.u32 %s1, 4
      %s28 = int_to_ptr.hbm [resolvable:$true] %s27
      %s29 = sshll.u32 [#allocation5], 4
      %s30 = int_to_ptr.vmem [resolvable:$true] %s29
      %32 = dma.hbm_to_vmem [thread:$0]  %s28, 32, %s30, [#allocation6]
    $region9: #{tpu_custom_call.1} parent=1 // pred_fallthru
      _
    // Predicated region
    $region10: #{tpu_custom_call.1} parent=1 // pred_check
      _
    $region11: #{tpu_custom_call.1} parent=1 // pred_check_branch
      %34 = sbr.rel (0) target = $region13
    $region12: #{tpu_custom_call.1} parent=1 // pred_region
      _
    $region13: #{tpu_custom_call.1} parent=1 // pred_fallthru
      _
    // Predicated region
    $region14: #{tpu_custom_call.1} parent=1 // pred_check
      _
    $region15: #{tpu_custom_call.1} parent=1 // pred_check_branch
      %36 = sbr.rel (0) target = $region17
    $region16: #{tpu_custom_call.1} parent=1 // pred_region
      %38 = dma.done [#allocation3], 32
    $region17: #{tpu_custom_call.1} parent=1 // pred_fallthru
      _
    // Predicated region
    $region18: #{tpu_custom_call.1} parent=1 // pred_check
      _
    $region19: #{tpu_custom_call.1} parent=1 // pred_check_branch
      %40 = sbr.rel (0) target = $region21
    $region20: #{tpu_custom_call.1} parent=1 // pred_region
      %42 = dma.done [#allocation6], 32
    $region21: #{tpu_custom_call.1} parent=1 // pred_fallthru
      _
    %v44 = vld [vmem:[#allocation2] sm:$0x3]
    %v45 = vpack.c.bf16 %v44, %v44
    %v46 = vld [vmem:[#allocation5] sm:$0x3]
    %v47 = vld [vmem:[%s2] sm:$0x1]
    %v49 = vperm.slane %v47, 0
    %vm51 = vcmask 23552
    %v53 = vsel %vm51, %v45, 0
    %vm55 = vcmask 1040384
    %vm56 = vcmask 1041408
    %v57 = vsel %vm55, 4294967295, 65535
    %v58 = vsel %vm56, %v57, 0
    %v60 = vand.u32 %v46, %v58
    %62 = vmatpush.bf16.msra.mxu0 0
    %63 = vmatpush.bf16.msra.mxu0 0
    %64 = vmatpush.bf16.msra.mxu0 0
    %65 = vmatpush.bf16.msra.mxu0 0
    %66 = vmatpush.bf16.msra.mxu0 0
    %67 = vmatpush.bf16.msra.mxu0 0
    %68 = vmatpush.bf16.msra.mxu0 0
    %69 = vmatpush.bf16.msra.mxu0 %v60
    %70 = vmatmul.bf16.gmra.mxu0 %v53
    %v71 = vpop.f32.mrf.mxu0
    %v72 = vadd.f32 %v49, %v71
    %v73 = vpop.f32.mrf.mxu0
    %74 = vdwg.mxu0
    %vm75 = vcmp.ge.f32.partialorder %v72, 0.0
    %v76 = vmul.f32 %v72, 0.01
    %v77 = vsel %vm75, %v72, %v76
    %vm78 = vcmask 517120
    %79 = vst.msk [vmem:[#allocation7] sm:$0x3] %vm78, %v77
    // Predicated region
    $region22: #{tpu_custom_call.1} parent=1 // pred_check
      _
    $region23: #{tpu_custom_call.1} parent=1 // pred_check_branch
      %81 = sbr.rel (0) target = $region25
    $region24: #{tpu_custom_call.1} parent=1 // pred_region
      %83 = vsyncadd [#allocation4], 0
      %s85 = sshll.u32 [#allocation7], 4
      %s86 = int_to_ptr.vmem [resolvable:$true] %s85
      %s87 = sshll.u32 %s3, 4
      %s88 = int_to_ptr.hbm [resolvable:$true] %s87
      %90 = dma.vmem_to_hbm [thread:$0]  %s86, 32, %s88, [#allocation4]
    $region25: #{tpu_custom_call.1} parent=1 // pred_fallthru
      _
    // Predicated region
    $region26: #{tpu_custom_call.1} parent=1 // pred_check
      _
    $region27: #{tpu_custom_call.1} parent=1 // pred_check_branch
      %92 = sbr.rel (0) target = $region29
    $region28: #{tpu_custom_call.1} parent=1 // pred_region
      %94 = dma.done [#allocation4], 32
    $region29: #{tpu_custom_call.1} parent=1 // pred_fallthru
      _
    %95 = vsyncpa [#allocation3], 1
    %96 = vsyncpa [#allocation6], 1
    %97 = vsyncpa [#allocation4], 1

</llo_original>
